<compile_context>
chip_gen: v6e
topology: v6e:2x2x1
jax: 0.10.0
libtpu: 0.0.40
codegen_flags: <defaults>
</compile_context>

<pallas_src>
import jax
import jax.numpy as jnp
from jax.experimental import pallas as pl
from jax.experimental.pallas import tpu as pltpu


def fire_kernel(x_ref, ws_ref, bs_ref, w0_ref, w1_ref, w2_ref, be_ref, out_ref):
    nb = x_ref.shape[0]                       # samples folded into this block
    L = x_ref.shape[2]
    csq = ws_ref.shape[0]
    cd = w1_ref.dtype                         # matmul-input dtype (f32 or bf16)

    ws = ws_ref[...]                          # (Csq, Cin)
    w0 = w0_ref[...]                          # (Cout, Csq)  tap l-1
    w1 = w1_ref[...]                          # (Cout, Csq)  tap l
    w2 = w2_ref[...]                          # (Cout, Csq)  tap l+1
    bs = bs_ref[...]                          # (Csq, 1)  f32
    be = be_ref[...]                          # (Cout, 1) f32
    zcol = jnp.zeros((csq, 1), jnp.float32)   # hoisted zero boundary column

    for n in range(nb):                       # static unroll over block samples
        x = x_ref[n]                          # (Cin, L)

        # ---- squeeze: 1x1 conv + ReLU (f32 accumulate, f32 elementwise) ----
        s = jnp.dot(ws, x, preferred_element_type=jnp.float32)
        s = jnp.maximum(s + bs, 0.0)          # (Csq, L)

        # ---- k=3 taps: shifted copies of s along L, zero padding=1 ---------
        s_prev = jnp.concatenate([zcol, s[:, : L - 1]], axis=1)   # s[l-1]
        s_next = jnp.concatenate([s[:, 1:], zcol], axis=1)        # s[l+1]

        # ---- fused expand1x1 + expand3x3 (+ bias + ReLU) -> (Cout, L) -------
        e = (jnp.dot(w1, s.astype(cd), preferred_element_type=jnp.float32)
             + jnp.dot(w0, s_prev.astype(cd), preferred_element_type=jnp.float32)
             + jnp.dot(w2, s_next.astype(cd), preferred_element_type=jnp.float32))
        out_ref[n] = jnp.maximum(e + be, 0.0).astype(out_ref.dtype)


def _pick_batch_block(n, cap=8):
    """Largest divisor of n (<= cap) that still leaves >=2 parallel grid steps
    (keeps both v7x TensorCores busy)."""
    best = 1
    for nb in range(1, min(n, cap) + 1):
        if n % nb == 0 and n // nb >= 2:
            best = nb
    return best


def fire_pallas(x_ncl, w_sq, b_sq, w_e1, b_e1, w_e3, b_e3, *,
                batch_block=None, compute_dtype=jnp.float32, out_dtype=None):
    """Fire forward pass.

    x_ncl : (N, Cin, L) in PyTorch Conv1d layout (consumed directly, no transpose).
    w_sq  : (Csq, Cin, 1), w_e1: (Ce1, Csq, 1), w_e3: (Ce3, Csq, 3)
    Returns (N, Ce1 + Ce3, L) = cat([expand1x1, expand3x3], channel axis).
    """
    N, Cin, L = x_ncl.shape
    Csq = w_sq.shape[0]
    Ce1 = w_e1.shape[0]
    Ce3 = w_e3.shape[0]
    Cout = Ce1 + Ce3
    out_dtype = x_ncl.dtype if out_dtype is None else out_dtype
    cd = compute_dtype

    # matmul-form weights:  y(Cout, L) = W(Cout, Cin) @ x(Cin, L)
    ws = w_sq[:, :, 0].astype(cd)                                    # (Csq, Cin)
    zpad = jnp.zeros((Ce1, Csq), cd)
    w0 = jnp.concatenate([zpad, w_e3[:, :, 0].astype(cd)], axis=0)   # tap l-1
    w1 = jnp.concatenate([w_e1[:, :, 0].astype(cd),
                          w_e3[:, :, 1].astype(cd)], axis=0)         # tap l
    w2 = jnp.concatenate([zpad, w_e3[:, :, 2].astype(cd)], axis=0)   # tap l+1
    bs = b_sq.reshape(Csq, 1).astype(jnp.float32)
    be = jnp.concatenate([b_e1, b_e3]).reshape(Cout, 1).astype(jnp.float32)
    x = x_ncl.astype(cd)

    if batch_block is None:
        batch_block = _pick_batch_block(N)
    assert N % batch_block == 0, (N, batch_block)
    grid = (N // batch_block,)

    # TODO(synk): for very large L, add an L grid axis with k=3 halo handling so
    # a (batch_block, Cin, TL) block stays inside the v7x 64 MiB VMEM budget.
    return pl.pallas_call(
        fire_kernel,
        out_shape=jax.ShapeDtypeStruct((N, Cout, L), out_dtype),
        grid_spec=pltpu.PrefetchScalarGridSpec(
            num_scalar_prefetch=0,
            grid=grid,
            in_specs=[
                pl.BlockSpec((batch_block, Cin, L), lambda n: (n, 0, 0)),
                pl.BlockSpec((Csq, Cin), lambda n: (0, 0)),   # weights stay
                pl.BlockSpec((Csq, 1), lambda n: (0, 0)),     # VMEM-resident
                pl.BlockSpec((Cout, Csq), lambda n: (0, 0)),
                pl.BlockSpec((Cout, Csq), lambda n: (0, 0)),
                pl.BlockSpec((Cout, Csq), lambda n: (0, 0)),
                pl.BlockSpec((Cout, 1), lambda n: (0, 0)),
            ],
            out_specs=pl.BlockSpec((batch_block, Cout, L), lambda n: (n, 0, 0)),
        ),
        compiler_params=pltpu.CompilerParams(
            dimension_semantics=("parallel",)),
    )(x, ws, bs, w0, w1, w2, be)


def fire_reference(x_ncl, w_sq, b_sq, w_e1, b_e1, w_e3, b_e3):
    """Pure-JAX reference matching PyTorch Fire semantics (func_type = ReLU)."""
    hp = jax.lax.Precision.HIGHEST
    s = jax.nn.relu(jnp.einsum("oc,ncl->nol", w_sq[:, :, 0], x_ncl, precision=hp)
                    + b_sq[None, :, None])
    e1 = jax.nn.relu(jnp.einsum("oc,ncl->nol", w_e1[:, :, 0], s, precision=hp)
                     + b_e1[None, :, None])
    sp = jnp.pad(s, ((0, 0), (0, 0), (1, 1)))
    e3 = (jnp.einsum("oc,ncl->nol", w_e3[:, :, 0], sp[:, :, :-2], precision=hp)
          + jnp.einsum("oc,ncl->nol", w_e3[:, :, 1], sp[:, :, 1:-1], precision=hp)
          + jnp.einsum("oc,ncl->nol", w_e3[:, :, 2], sp[:, :, 2:], precision=hp))
    e3 = jax.nn.relu(e3 + b_e3[None, :, None])
    return jnp.concatenate([e1, e3], axis=1)


if __name__ == "__main__":
    # Fire(inputs=8, squeeze_num=4, expand1X1_num=8, expand3X3_num=8, func_type=nn.ReLU)
    N, Cin, L = 2, 8, 128          # L on the lane axis -> lane-dense output
    Csq, Ce1, Ce3 = 4, 8, 8

    key = jax.random.PRNGKey(0)
    k = jax.random.split(key, 7)
    x = jax.random.normal(k[0], (N, Cin, L), dtype=jnp.float32)
    w_sq = jax.random.normal(k[1], (Csq, Cin, 1), dtype=jnp.float32) * 0.3
    b_sq = jax.random.normal(k[2], (Csq,), dtype=jnp.float32) * 0.1
    w_e1 = jax.random.normal(k[3], (Ce1, Csq, 1), dtype=jnp.float32) * 0.3
    b_e1 = jax.random.normal(k[4], (Ce1,), dtype=jnp.float32) * 0.1
    w_e3 = jax.random.normal(k[5], (Ce3, Csq, 3), dtype=jnp.float32) * 0.3
    b_e3 = jax.random.normal(k[6], (Ce3,), dtype=jnp.float32) * 0.1

    out = fire_pallas(x, w_sq, b_sq, w_e1, b_e1, w_e3, b_e3)
    out = jax.block_until_ready(out)
    ref = fire_reference(x, w_sq, b_sq, w_e1, b_e1, w_e3, b_e3)

    assert out.shape == (N, Ce1 + Ce3, L), out.shape
    # MXU f32 matmuls at default precision are not bit-exact f32 -> loose smoke
    # tolerance; real bugs (tap order, bias, concat order) give O(0.1+) errors.
    assert jnp.allclose(out, ref, atol=2e-2, rtol=2e-2), \
        float(jnp.max(jnp.abs(out - ref)))

    # Optional perf path from the review: bf16 matmul inputs, f32 accumulate.
    out_bf = fire_pallas(x, w_sq, b_sq, w_e1, b_e1, w_e3, b_e3,
                         compute_dtype=jnp.bfloat16)
    out_bf = jax.block_until_ready(out_bf)
    assert jnp.allclose(out_bf, ref, atol=1e-1, rtol=1e-1)

    print("KERNEL_OK")
</pallas_src>

<mosaic_0001>
module attributes {stable_mosaic.version = 11 : i64} {
  func.func @fire_kernel(%arg0: i32, %arg1: memref<1x8x128xf32, #tpu.memory_space<vmem>>, %arg2: memref<4x8xf32, #tpu.memory_space<vmem>>, %arg3: memref<4x1xf32, #tpu.memory_space<vmem>>, %arg4: memref<16x4xf32, #tpu.memory_space<vmem>>, %arg5: memref<16x4xf32, #tpu.memory_space<vmem>>, %arg6: memref<16x4xf32, #tpu.memory_space<vmem>>, %arg7: memref<16x1xf32, #tpu.memory_space<vmem>>, %arg8: memref<1x16x128xf32, #tpu.memory_space<vmem>>) attributes {dimension_semantics = [#tpu.dimension_semantics<parallel>], iteration_bounds = array<i64: 2>, scalar_prefetch = 0 : i64, scratch_operands = 0 : i64, tpu.core_type = #tpu.core_type<tc>, window_params = [{transform_indices = @transform_0, window_bounds = array<i64: 1, 8, 128>}, {pipeline_mode = #tpu.pipeline_mode<synchronous>, transform_indices = @transform_1, window_bounds = array<i64: 4, 8>}, {pipeline_mode = #tpu.pipeline_mode<synchronous>, transform_indices = @transform_2, window_bounds = array<i64: 4, 1>}, {pipeline_mode = #tpu.pipeline_mode<synchronous>, transform_indices = @transform_3, window_bounds = array<i64: 16, 4>}, {pipeline_mode = #tpu.pipeline_mode<synchronous>, transform_indices = @transform_4, window_bounds = array<i64: 16, 4>}, {pipeline_mode = #tpu.pipeline_mode<synchronous>, transform_indices = @transform_5, window_bounds = array<i64: 16, 4>}, {pipeline_mode = #tpu.pipeline_mode<synchronous>, transform_indices = @transform_6, window_bounds = array<i64: 16, 1>}, {transform_indices = @transform_7, window_bounds = array<i64: 1, 16, 128>}]} {
    %c0 = arith.constant 0 : index
    %c0_0 = arith.constant 0 : index
    %0 = vector.load %arg2[%c0, %c0_0] : memref<4x8xf32, #tpu.memory_space<vmem>>, vector<4x8xf32>
    %c0_1 = arith.constant 0 : index
    %c0_2 = arith.constant 0 : index
    %1 = vector.load %arg4[%c0_1, %c0_2] : memref<16x4xf32, #tpu.memory_space<vmem>>, vector<16x4xf32>
    %c0_3 = arith.constant 0 : index
    %c0_4 = arith.constant 0 : index
    %2 = vector.load %arg5[%c0_3, %c0_4] : memref<16x4xf32, #tpu.memory_space<vmem>>, vector<16x4xf32>
    %c0_5 = arith.constant 0 : index
    %c0_6 = arith.constant 0 : index
    %3 = vector.load %arg6[%c0_5, %c0_6] : memref<16x4xf32, #tpu.memory_space<vmem>>, vector<16x4xf32>
    %c0_7 = arith.constant 0 : index
    %c0_8 = arith.constant 0 : index
    %4 = vector.load %arg3[%c0_7, %c0_8] : memref<4x1xf32, #tpu.memory_space<vmem>>, vector<4x1xf32>
    %c0_9 = arith.constant 0 : index
    %c0_10 = arith.constant 0 : index
    %5 = vector.load %arg7[%c0_9, %c0_10] : memref<16x1xf32, #tpu.memory_space<vmem>>, vector<16x1xf32>
    %cst = arith.constant 0.000000e+00 : f32
    %6 = vector.broadcast %cst : f32 to vector<4x1xf32>
    %c0_11 = arith.constant 0 : index
    %c0_12 = arith.constant 0 : index
    %c0_13 = arith.constant 0 : index
    %7 = vector.load %arg1[%c0_11, %c0_12, %c0_13] : memref<1x8x128xf32, #tpu.memory_space<vmem>>, vector<1x8x128xf32>
    %8 = vector.shape_cast %7 : vector<1x8x128xf32> to vector<8x128xf32>
    %cst_14 = arith.constant dense<0.000000e+00> : vector<4x128xf32>
    %9 = tpu.matmul %0, %8, %cst_14 {dimension_numbers = #tpu.dot_dimension_numbers<[1], [0], [0], [1], [0, 0, 1, 1], [], []>} : vector<4x8xf32>, vector<8x128xf32>, vector<4x128xf32> -> vector<4x128xf32>
    %10 = vector.broadcast %4 : vector<4x1xf32> to vector<4x128xf32>
    %11 = arith.addf %9, %10 : vector<4x128xf32>
    %cst_15 = arith.constant 0.000000e+00 : f32
    %12 = vector.broadcast %cst_15 : f32 to vector<4x128xf32>
    %13 = arith.maximumf %11, %12 : vector<4x128xf32>
    %14 = vector.extract_strided_slice %13 {offsets = [0, 0], sizes = [4, 127], strides = [1, 1]} : vector<4x128xf32> to vector<4x127xf32>
    %15 = tpu.concatenate %6, %14 in 1 : vector<4x1xf32>, vector<4x127xf32> -> vector<4x128xf32>
    %16 = vector.extract_strided_slice %13 {offsets = [0, 1], sizes = [4, 127], strides = [1, 1]} : vector<4x128xf32> to vector<4x127xf32>
    %17 = tpu.concatenate %16, %6 in 1 : vector<4x127xf32>, vector<4x1xf32> -> vector<4x128xf32>
    %cst_16 = arith.constant dense<0.000000e+00> : vector<16x128xf32>
    %18 = tpu.matmul %2, %13, %cst_16 {dimension_numbers = #tpu.dot_dimension_numbers<[1], [0], [0], [1], [0, 0, 1, 1], [], []>} : vector<16x4xf32>, vector<4x128xf32>, vector<16x128xf32> -> vector<16x128xf32>
    %cst_17 = arith.constant dense<0.000000e+00> : vector<16x128xf32>
    %19 = tpu.matmul %1, %15, %cst_17 {dimension_numbers = #tpu.dot_dimension_numbers<[1], [0], [0], [1], [0, 0, 1, 1], [], []>} : vector<16x4xf32>, vector<4x128xf32>, vector<16x128xf32> -> vector<16x128xf32>
    %20 = arith.addf %18, %19 : vector<16x128xf32>
    %cst_18 = arith.constant dense<0.000000e+00> : vector<16x128xf32>
    %21 = tpu.matmul %3, %17, %cst_18 {dimension_numbers = #tpu.dot_dimension_numbers<[1], [0], [0], [1], [0, 0, 1, 1], [], []>} : vector<16x4xf32>, vector<4x128xf32>, vector<16x128xf32> -> vector<16x128xf32>
    %22 = arith.addf %20, %21 : vector<16x128xf32>
    %23 = vector.broadcast %5 : vector<16x1xf32> to vector<16x128xf32>
    %24 = arith.addf %22, %23 : vector<16x128xf32>
    %cst_19 = arith.constant 0.000000e+00 : f32
    %25 = vector.broadcast %cst_19 : f32 to vector<16x128xf32>
    %26 = arith.maximumf %24, %25 : vector<16x128xf32>
    %c0_20 = arith.constant 0 : index
    %c0_21 = arith.constant 0 : index
    %c0_22 = arith.constant 0 : index
    %27 = vector.load %arg8[%c0_20, %c0_21, %c0_22] : memref<1x16x128xf32, #tpu.memory_space<vmem>>, vector<1x16x128xf32>
    %28 = vector.shape_cast %27 : vector<1x16x128xf32> to vector<16x128xf32>
    %29 = vector.shape_cast %26 : vector<16x128xf32> to vector<1x16x128xf32>
    tpu.vector_store %arg8[%c0_20, %c0_21, %c0_22], %29 {strides = array<i32>} : memref<1x16x128xf32, #tpu.memory_space<vmem>>, vector<1x16x128xf32>,
    return
  }
  func.func @transform_0(%arg0: i32) -> (i32, i32, i32) {
    %c0_i32 = arith.constant 0 : i32
    %c0_i32_0 = arith.constant 0 : i32
    %c0_i32_1 = arith.constant 0 : i32
    return %arg0, %c0_i32, %c0_i32_0 : i32, i32, i32
  }
  func.func @transform_1(%arg0: i32) -> (i32, i32) {
    %c0_i32 = arith.constant 0 : i32
    %c0_i32_0 = arith.constant 0 : i32
    %c0_i32_1 = arith.constant 0 : i32
    return %c0_i32, %c0_i32_0 : i32, i32
  }
  func.func @transform_2(%arg0: i32) -> (i32, i32) {
    %c0_i32 = arith.constant 0 : i32
    %c0_i32_0 = arith.constant 0 : i32
    %c0_i32_1 = arith.constant 0 : i32
    return %c0_i32, %c0_i32_0 : i32, i32
  }
  func.func @transform_3(%arg0: i32) -> (i32, i32) {
    %c0_i32 = arith.constant 0 : i32
    %c0_i32_0 = arith.constant 0 : i32
    %c0_i32_1 = arith.constant 0 : i32
    return %c0_i32, %c0_i32_0 : i32, i32
  }
  func.func @transform_4(%arg0: i32) -> (i32, i32) {
    %c0_i32 = arith.constant 0 : i32
    %c0_i32_0 = arith.constant 0 : i32
    %c0_i32_1 = arith.constant 0 : i32
    return %c0_i32, %c0_i32_0 : i32, i32
  }
  func.func @transform_5(%arg0: i32) -> (i32, i32) {
    %c0_i32 = arith.constant 0 : i32
    %c0_i32_0 = arith.constant 0 : i32
    %c0_i32_1 = arith.constant 0 : i32
    return %c0_i32, %c0_i32_0 : i32, i32
  }
  func.func @transform_6(%arg0: i32) -> (i32, i32) {
    %c0_i32 = arith.constant 0 : i32
    %c0_i32_0 = arith.constant 0 : i32
    %c0_i32_1 = arith.constant 0 : i32
    return %c0_i32, %c0_i32_0 : i32, i32
  }
  func.func @transform_7(%arg0: i32) -> (i32, i32, i32) {
    %c0_i32 = arith.constant 0 : i32
    %c0_i32_0 = arith.constant 0 : i32
    %c0_i32_1 = arith.constant 0 : i32
    return %arg0, %c0_i32, %c0_i32_0 : i32, i32, i32
  }
}

</mosaic_0001>

<llo_original>
// kernel: tpu_custom_call.1
$region0: #{tpu_custom_call.1}
  #allocation0 [shape = 'u32[]', space=smem, size = 0x4, offset = 0x4, fixed_abs, tag = 'smem constant byte address 0x4 - core index']
  #allocation1 [shape = 'u32[144,128]{1,0:T(1,128)}', space=vmem, size = 0x12000, scoped, tag = 'internal scratch']
  %s0 = inlined_call_operand.vmem [shape: f32[2,8,128], index: 0, kind: input, shape index: {}]
  %s1 = inlined_call_operand.vmem [shape: f32[4,8], index: 1, kind: input, shape index: {}]
  %s2 = inlined_call_operand.vmem [shape: f32[4,1], index: 2, kind: input, shape index: {}]
  %s3 = inlined_call_operand.vmem [shape: f32[16,4], index: 3, kind: input, shape index: {}]
  %s4 = inlined_call_operand.vmem [shape: f32[16,4], index: 4, kind: input, shape index: {}]
  %s5 = inlined_call_operand.vmem [shape: f32[16,4], index: 5, kind: input, shape index: {}]
  %s6 = inlined_call_operand.vmem [shape: f32[16,1], index: 6, kind: input, shape index: {}]
  %s7 = inlined_call_operand.hbm [shape: f32[2,16,128], index: 7, kind: output, shape index: {}]
  %s8 = sld [smem:[#allocation0]]
  $region61: #{tpu_custom_call.1} parent=0
    _
  %s10 = ssub.s32 1, %s8
  %s11 = scalar_select 0, %s10, %s8
  $region1: #{tpu_custom_call.1} parent=0
    #allocation2 [shape = 'u8[16384]{0}', space=vmem, size = 0x4000, scoped, tag = 'output window, operand 0']
    #allocation3 [shape = 's32[2]{0}', space=sflag, size = 0x8, scoped, tag = 'scoped memory for tpu_custom_call.1']
    %12 = vsyncpa [#allocation3], 0
    %s13 = scalar_lea.sflag [#allocation3], 1
    %14 = vsyncpa %s13, 0
    loop: start=0, step=1, limit=4
    $region2: #{tpu_custom_call.1} parent=1 // loop_pre_header
      _
    $region3: #{tpu_custom_call.1} parent=1 // loop_header
      %s16 = sphi 0, %s20
      %p17 = scmp.ge.s32.totalorder %s16, 4
      %s26 = sphi 0, %s28
      %s29 = sphi 0, %s26
      %s30 = sphi 0, %s29
      %s46 = sphi 0, %s30
      %s50 = sphi 0, %s50
      %s52 = sphi 0, %s50
      %s53 = sphi 0, %s52
      %s67 = sphi 0, %s53
      %s71 = sphi 0, %s71
      %s73 = sphi 0, %s71
      %s74 = sphi 0, %s73
      %s88 = sphi 0, %s74
      %s92 = sphi 0, %s92
      %s94 = sphi 0, %s92
      %s95 = sphi 0, %s94
      %s109 = sphi 0, %s95
      %s113 = sphi 0, %s113
      %s115 = sphi 0, %s113
      %s116 = sphi 0, %s115
      %s130 = sphi 0, %s116
      %s134 = sphi 0, %s134
      %s136 = sphi 0, %s134
      %s137 = sphi 0, %s136
      %s151 = sphi 0, %s137
      %s155 = sphi 0, %s155
      %s157 = sphi 0, %s155
      %s158 = sphi 0, %s157
      %s172 = sphi 0, %s158
      %s178 = sphi 0, %s180
      %s181 = sphi 0, %s178
      %s182 = sphi 0, %s181
      %s198 = sphi 0, %s182
    $region4: #{tpu_custom_call.1} parent=1 // loop_header_branch
      %19 = sbr.rel (%p17) target = $region8
    $region5: #{tpu_custom_call.1} parent=1 // loop_body
      %s21 = ssub.s32 %s16, 1
      %s22 = ssub.s32 %s16, 2
      %s23 = sadd.s32 %s16, 1
      %s24 = ssub.s32 %s16, %s23
      %p25 = scmp.eq.s32.totalorder %s24, 0
      %s27 = sadd.s32 %s26, 1
      %s28 = scalar_select %p25, %s26, %s27
      %p31 = pneg %p25
      %p32 = scmp.eq.s32.totalorder %s16, 1
      %p33 = por %p31, %p32
      %p34 = scmp.ne.s32.totalorder %s26, %s29
      %p35 = scmp.eq.s32.totalorder %s16, 0
      %p36 = por %p34, %p35
      %p37 = scmp.ne.s32.totalorder %s26, %s29
      %p38 = scmp.eq.s32.totalorder %s21, 1
      %p39 = por %p37, %p38
      %p40 = scmp.ne.s32.totalorder %s29, %s30
      %p41 = scmp.eq.s32.totalorder %s21, 0
      %p42 = por %p40, %p41
      %p43 = scmp.ne.s32.totalorder %s29, %s30
      %p44 = scmp.eq.s32.totalorder %s22, 1
      %p45 = por %p43, %p44
      %p47 = scmp.ne.s32.totalorder %s30, %s46
      %p48 = scmp.eq.s32.totalorder %s22, 0
      %p49 = por %p47, %p48
      %s51 = sadd.s32 %s50, 1
      %p54 = scmp.eq.s32.totalorder %s16, 1
      %p55 = scmp.ne.s32.totalorder %s50, %s52
      %p56 = scmp.eq.s32.totalorder %s16, 0
      %p57 = por %p55, %p56
      %p58 = scmp.ne.s32.totalorder %s50, %s52
      %p59 = scmp.eq.s32.totalorder %s21, 1
      %p60 = por %p58, %p59
      %p61 = scmp.ne.s32.totalorder %s52, %s53
      %p62 = scmp.eq.s32.totalorder %s21, 0
      %p63 = por %p61, %p62
      %p64 = scmp.ne.s32.totalorder %s52, %s53
      %p65 = scmp.eq.s32.totalorder %s22, 1
      %p66 = por %p64, %p65
      %p68 = scmp.ne.s32.totalorder %s53, %s67
      %p69 = scmp.eq.s32.totalorder %s22, 0
      %p70 = por %p68, %p69
      %s72 = sadd.s32 %s71, 1
      %p75 = scmp.eq.s32.totalorder %s16, 1
      %p76 = scmp.ne.s32.totalorder %s71, %s73
      %p77 = scmp.eq.s32.totalorder %s16, 0
      %p78 = por %p76, %p77
      %p79 = scmp.ne.s32.totalorder %s71, %s73
      %p80 = scmp.eq.s32.totalorder %s21, 1
      %p81 = por %p79, %p80
      %p82 = scmp.ne.s32.totalorder %s73, %s74
      %p83 = scmp.eq.s32.totalorder %s21, 0
      %p84 = por %p82, %p83
      %p85 = scmp.ne.s32.totalorder %s73, %s74
      %p86 = scmp.eq.s32.totalorder %s22, 1
      %p87 = por %p85, %p86
      %p89 = scmp.ne.s32.totalorder %s74, %s88
      %p90 = scmp.eq.s32.totalorder %s22, 0
      %p91 = por %p89, %p90
      %s93 = sadd.s32 %s92, 1
      %p96 = scmp.eq.s32.totalorder %s16, 1
      %p97 = scmp.ne.s32.totalorder %s92, %s94
      %p98 = scmp.eq.s32.totalorder %s16, 0
      %p99 = por %p97, %p98
      %p100 = scmp.ne.s32.totalorder %s92, %s94
      %p101 = scmp.eq.s32.totalorder %s21, 1
      %p102 = por %p100, %p101
      %p103 = scmp.ne.s32.totalorder %s94, %s95
      %p104 = scmp.eq.s32.totalorder %s21, 0
      %p105 = por %p103, %p104
      %p106 = scmp.ne.s32.totalorder %s94, %s95
      %p107 = scmp.eq.s32.totalorder %s22, 1
      %p108 = por %p106, %p107
      %p110 = scmp.ne.s32.totalorder %s95, %s109
      %p111 = scmp.eq.s32.totalorder %s22, 0
      %p112 = por %p110, %p111
      %s114 = sadd.s32 %s113, 1
      %p117 = scmp.eq.s32.totalorder %s16, 1
      %p118 = scmp.ne.s32.totalorder %s113, %s115
      %p119 = scmp.eq.s32.totalorder %s16, 0
      %p120 = por %p118, %p119
      %p121 = scmp.ne.s32.totalorder %s113, %s115
      %p122 = scmp.eq.s32.totalorder %s21, 1
      %p123 = por %p121, %p122
      %p124 = scmp.ne.s32.totalorder %s115, %s116
      %p125 = scmp.eq.s32.totalorder %s21, 0
      %p126 = por %p124, %p125
      %p127 = scmp.ne.s32.totalorder %s115, %s116
      %p128 = scmp.eq.s32.totalorder %s22, 1
      %p129 = por %p127, %p128
      %p131 = scmp.ne.s32.totalorder %s116, %s130
      %p132 = scmp.eq.s32.totalorder %s22, 0
      %p133 = por %p131, %p132
      %s135 = sadd.s32 %s134, 1
      %p138 = scmp.eq.s32.totalorder %s16, 1
      %p139 = scmp.ne.s32.totalorder %s134, %s136
      %p140 = scmp.eq.s32.totalorder %s16, 0
      %p141 = por %p139, %p140
      %p142 = scmp.ne.s32.totalorder %s134, %s136
      %p143 = scmp.eq.s32.totalorder %s21, 1
      %p144 = por %p142, %p143
      %p145 = scmp.ne.s32.totalorder %s136, %s137
      %p146 = scmp.eq.s32.totalorder %s21, 0
      %p147 = por %p145, %p146
      %p148 = scmp.ne.s32.totalorder %s136, %s137
      %p149 = scmp.eq.s32.totalorder %s22, 1
      %p150 = por %p148, %p149
      %p152 = scmp.ne.s32.totalorder %s137, %s151
      %p153 = scmp.eq.s32.totalorder %s22, 0
      %p154 = por %p152, %p153
      %s156 = sadd.s32 %s155, 1
      %p159 = scmp.eq.s32.totalorder %s16, 1
      %p160 = scmp.ne.s32.totalorder %s155, %s157
      %p161 = scmp.eq.s32.totalorder %s16, 0
      %p162 = por %p160, %p161
      %p163 = scmp.ne.s32.totalorder %s155, %s157
      %p164 = scmp.eq.s32.totalorder %s21, 1
      %p165 = por %p163, %p164
      %p166 = scmp.ne.s32.totalorder %s157, %s158
      %p167 = scmp.eq.s32.totalorder %s21, 0
      %p168 = por %p166, %p167
      %p169 = scmp.ne.s32.totalorder %s157, %s158
      %p170 = scmp.eq.s32.totalorder %s22, 1
      %p171 = por %p169, %p170
      %p173 = scmp.ne.s32.totalorder %s158, %s172
      %p174 = scmp.eq.s32.totalorder %s22, 0
      %p175 = por %p173, %p174
      %s176 = ssub.s32 %s16, %s23
      %p177 = scmp.eq.s32.totalorder %s176, 0
      %s179 = sadd.s32 %s178, 1
      %s180 = scalar_select %p177, %s178, %s179
      %p183 = pneg %p177
      %p184 = scmp.eq.s32.totalorder %s16, 1
      %p185 = por %p183, %p184
      %p186 = scmp.ne.s32.totalorder %s178, %s181
      %p187 = scmp.eq.s32.totalorder %s16, 0
      %p188 = por %p186, %p187
      %p189 = scmp.ne.s32.totalorder %s178, %s181
      %p190 = scmp.eq.s32.totalorder %s21, 1
      %p191 = por %p189, %p190
      %p192 = scmp.ne.s32.totalorder %s181, %s182
      %p193 = scmp.eq.s32.totalorder %s21, 0
      %p194 = por %p192, %p193
      %p195 = scmp.ne.s32.totalorder %s181, %s182
      %p196 = scmp.eq.s32.totalorder %s22, 1
      %p197 = por %p195, %p196
      %p199 = scmp.ne.s32.totalorder %s182, %s198
      %p200 = scmp.eq.s32.totalorder %s22, 0
      %p201 = por %p199, %p200
      %p202 = scmp.le.s32.totalorder 1, %s16
      %p203 = scmp.lt.s32.totalorder %s16, 3
      %p204 = pnand %p202, %p203
      %p205 = pneg %p204
      // Predicated region
      $region9: #{tpu_custom_call.1} parent=5 // pred_check
        _
      $region10: #{tpu_custom_call.1} parent=5 // pred_check_branch
        %207 = sbr.rel (%p204) target = $region12
      $region11: #{tpu_custom_call.1} parent=5 // pred_region
        %s208 = ssub.s32 %s16, 1
        // Predicated region
        $region13: #{tpu_custom_call.1} parent=11 // pred_check
          %p209 = pneg %p63
        $region14: #{tpu_custom_call.1} parent=11 // pred_check_branch
          %211 = sbr.rel (%p209) target = $region16
        $region15: #{tpu_custom_call.1} parent=11 // pred_region
          _
        $region16: #{tpu_custom_call.1} parent=11 // pred_fallthru
          _
        // Predicated region
        $region17: #{tpu_custom_call.1} parent=11 // pred_check
          %p212 = pneg %p84
        $region18: #{tpu_custom_call.1} parent=11 // pred_check_branch
          %214 = sbr.rel (%p212) target = $region20
        $region19: #{tpu_custom_call.1} parent=11 // pred_region
          _
        $region20: #{tpu_custom_call.1} parent=11 // pred_fallthru
          _
        // Predicated region
        $region21: #{tpu_custom_call.1} parent=11 // pred_check
          %p215 = pneg %p105
        $region22: #{tpu_custom_call.1} parent=11 // pred_check_branch
          %217 = sbr.rel (%p215) target = $region24
        $region23: #{tpu_custom_call.1} parent=11 // pred_region
          _
        $region24: #{tpu_custom_call.1} parent=11 // pred_fallthru
          _
        // Predicated region
        $region25: #{tpu_custom_call.1} parent=11 // pred_check
          %p218 = pneg %p126
        $region26: #{tpu_custom_call.1} parent=11 // pred_check_branch
          %220 = sbr.rel (%p218) target = $region28
        $region27: #{tpu_custom_call.1} parent=11 // pred_region
          _
        $region28: #{tpu_custom_call.1} parent=11 // pred_fallthru
          _
        // Predicated region
        $region29: #{tpu_custom_call.1} parent=11 // pred_check
          %p221 = pneg %p147
        $region30: #{tpu_custom_call.1} parent=11 // pred_check_branch
          %223 = sbr.rel (%p221) target = $region32
        $region31: #{tpu_custom_call.1} parent=11 // pred_region
          _
        $region32: #{tpu_custom_call.1} parent=11 // pred_fallthru
          _
        // Predicated region
        $region33: #{tpu_custom_call.1} parent=11 // pred_check
          %p224 = pneg %p168
        $region34: #{tpu_custom_call.1} parent=11 // pred_check_branch
          %226 = sbr.rel (%p224) target = $region36
        $region35: #{tpu_custom_call.1} parent=11 // pred_region
          _
        $region36: #{tpu_custom_call.1} parent=11 // pred_fallthru
          _
      $region12: #{tpu_custom_call.1} parent=5 // pred_fallthru
        _
      %p227 = scmp.lt.s32.totalorder %s16, 2
      // Predicated region
      $region37: #{tpu_custom_call.1} parent=5 // pred_check
        %p228 = pneg %p227
      $region38: #{tpu_custom_call.1} parent=5 // pred_check_branch
        %230 = sbr.rel (%p228) target = $region40
      $region39: #{tpu_custom_call.1} parent=5 // pred_region
        // Predicated region
        $region41: #{tpu_custom_call.1} parent=39 // pred_check
          %p231 = pneg %p36
        $region42: #{tpu_custom_call.1} parent=39 // pred_check_branch
          %233 = sbr.rel (%p231) target = $region44
        $region43: #{tpu_custom_call.1} parent=39 // pred_region
          %p234 = scmp.lt.s32.totalorder %s16, 1
          %s235 = scalar_select %p234, %s16, 1
          %s236 = smul.addr %s235, 8
          %s237 = scalar_lea.vmem %s0, %s236
        $region44: #{tpu_custom_call.1} parent=39 // pred_fallthru
          _
      $region40: #{tpu_custom_call.1} parent=5 // pred_fallthru
        _
      %p238 = scmp.le.s32.totalorder 1, %s16
      %p239 = scmp.lt.s32.totalorder %s16, 3
      %p240 = pnand %p238, %p239
      %p241 = pneg %p240
      // Predicated region
      $region45: #{tpu_custom_call.1} parent=5 // pred_check
        _
      $region46: #{tpu_custom_call.1} parent=5 // pred_check_branch
        %243 = sbr.rel (%p240) target = $region48
      $region47: #{tpu_custom_call.1} parent=5 // pred_region
        %s244 = ssub.s32 %s16, 1
        %p245 = scmp.lt.s32.totalorder %s21, 1
        %s246 = scalar_select %p245, %s21, 1
        %s247 = smul.addr %s246, 8
        %s248 = scalar_lea.vmem %s0, %s247
        %p249 = pneg %p42
        %p250 = pneg %p39
        %p251 = pneg %p63
        %p252 = pneg %p60
        %p253 = pneg %p84
        %p254 = pneg %p81
        %p255 = pneg %p105
        %p256 = pneg %p102
        %p257 = pneg %p126
        %p258 = pneg %p123
        %p259 = pneg %p147
        %p260 = pneg %p144
        %p261 = pneg %p168
        %p262 = pneg %p165
        %p263 = pneg %p194
        %p264 = pneg %p191
        %s265 = sand.u32 %s181, 1
        %s266 = scalar_lea.sflag [#allocation3], %s265
        %s267 = sand.u32 %s181, 1
        %s268 = smul.addr %s267, 16
        %s269 = scalar_lea.vmem [#allocation2], %s268
        %p270 = scmp.lt.s32.totalorder %s21, 1
        %s271 = scalar_select %p270, %s21, 1
        %s272 = smul.addr %s271, 8
        %s273 = scalar_lea.vmem %s0, %s272
        %v274 = vld [vmem:[%s1] sm:$0xf]
        %v275 = vld [vmem:[%s3] sm:$0xff]
        %v276 = vld [vmem:[%s3 + $0x8] sm:$0xff]
        %v277 = vld [vmem:[%s4] sm:$0xff]
        %v278 = vld [vmem:[%s4 + $0x8] sm:$0xff]
        %v279 = vld [vmem:[%s5] sm:$0xff]
        %v280 = vld [vmem:[%s5 + $0x8] sm:$0xff]
        %v281 = vld [vmem:[%s2] sm:$0xf]
        %v282 = vld [vmem:[%s6] sm:$0xff]
        %v283 = vld [vmem:[%s6 + $0x8] sm:$0xff]
        %v284 = vld [vmem:[%s273] sm:$0xff]
        %286 = vset.pattern.permute.xlu0 0
        %287 = vperm.xlu0 %286, %v281
        %v288 = vpop.permute.xlu0 %287
        %vm290 = vcmask 64512
        %v292 = vsel %vm290, %v274, 0
        %294 = vmatprep.subr.mxu0 0.0
        %295 = vmatpush1.msra.mxu0 0.0
        %296 = vmatprep.subr.mxu0 0.0
        %297 = vmatpush1.msra.mxu0 0.0
        %298 = vmatprep.subr.mxu0 0.0
        %299 = vmatpush1.msra.mxu0 0.0
        %300 = vmatprep.subr.mxu0 0.0
        %301 = vmatpush1.msra.mxu0 0.0
        %302 = vmatprep.subr.mxu0 0.0
        %303 = vmatpush1.msra.mxu0 0.0
        %304 = vmatprep.subr.mxu0 0.0
        %305 = vmatpush1.msra.mxu0 0.0
        %306 = vmatprep.subr.mxu0 0.0
        %307 = vmatpush1.msra.mxu0 0.0
        %308 = vmatprep.subr.mxu0 0.0
        %309 = vmatpush1.msra.mxu0 0.0
        %310 = vmatprep.subr.mxu0 0.0
        %311 = vmatpush1.msra.mxu0 0.0
        %312 = vmatprep.subr.mxu0 0.0
        %313 = vmatpush1.msra.mxu0 0.0
        %314 = vmatprep.subr.mxu0 0.0
        %315 = vmatpush1.msra.mxu0 0.0
        %316 = vmatprep.subr.mxu0 0.0
        %317 = vmatpush1.msra.mxu0 0.0
        %318 = vmatprep.subr.mxu0 0.0
        %319 = vmatpush1.msra.mxu0 0.0
        %320 = vmatprep.subr.mxu0 0.0
        %321 = vmatpush1.msra.mxu0 0.0
        %322 = vmatprep.subr.mxu0 0.0
        %323 = vmatpush1.msra.mxu0 0.0
        %324 = vmatprep.subr.mxu0 0.0
        %325 = vmatpush1.msra.mxu0 %v284
        %326 = vmatprep.subr.mxu0 0.0
        %327 = vmatpush2.msra.mxu0 0.0
        %328 = vmatprep.subr.mxu0 0.0
        %329 = vmatpush2.msra.mxu0 0.0
        %330 = vmatprep.subr.mxu0 0.0
        %331 = vmatpush2.msra.mxu0 0.0
        %332 = vmatprep.subr.mxu0 0.0
        %333 = vmatpush2.msra.mxu0 0.0
        %334 = vmatprep.subr.mxu0 0.0
        %335 = vmatpush2.msra.mxu0 0.0
        %336 = vmatprep.subr.mxu0 0.0
        %337 = vmatpush2.msra.mxu0 0.0
        %338 = vmatprep.subr.mxu0 0.0
        %339 = vmatpush2.msra.mxu0 0.0
        %340 = vmatprep.subr.mxu0 0.0
        %341 = vmatpush2.msra.mxu0 0.0
        %342 = vmatprep.subr.mxu0 0.0
        %343 = vmatpush2.msra.mxu0 0.0
        %344 = vmatprep.subr.mxu0 0.0
        %345 = vmatpush2.msra.mxu0 0.0
        %346 = vmatprep.subr.mxu0 0.0
        %347 = vmatpush2.msra.mxu0 0.0
        %348 = vmatprep.subr.mxu0 0.0
        %349 = vmatpush2.msra.mxu0 0.0
        %350 = vmatprep.subr.mxu0 0.0
        %351 = vmatpush2.msra.mxu0 0.0
        %352 = vmatprep.subr.mxu0 0.0
        %353 = vmatpush2.msra.mxu0 0.0
        %354 = vmatprep.subr.mxu0 0.0
        %355 = vmatpush2.msra.mxu0 0.0
        %356 = vmatprep.subr.mxu0 0.0
        %357 = vmatpush2.msra.mxu0 0.0
        %358 = vmatprep.mubr.f32.mxu0 0.0
        %359 = vmatmul.mubr.f32.gmra.mxu0 %v292
        %v360 = vpop.f32.mrf.mxu0
        %v361 = vadd.f32 %v288, %v360
        %v362 = vpop.f32.mrf.mxu0
        %363 = vdwg.mxu0
        %v364 = vmax.f32 %v361, 0.0
        %366 = vrot.lane.b32.xlu0 %v364, 1
        %v367 = vpop.permute.xlu0 %366
        %vm369 = vcmask 7168
        %v370 = vsel %vm369, 0.0, %v367
        %371 = vrot.lane.b32.xlu0 %v364, 127
        %v372 = vpop.permute.xlu0 %371
        %vm374 = vcmask 1039360
        %v375 = vsel %vm374, %v372, 0.0
        %vm376 = vcmask 31744
        %v378 = vsel %vm376, %v275, 0
        %v381 = vsel %vm376, %v276, 0
        %vm383 = vcmask 1043456
        %v385 = vsel %vm383, %v370, 0
        %387 = vmatprep.subr.mxu0 0.0
        %388 = vmatpush1.msra.mxu0 0.0
        %389 = vmatprep.subr.mxu0 0.0
        %390 = vmatpush1.msra.mxu0 0.0
        %391 = vmatprep.subr.mxu0 0.0
        %392 = vmatpush1.msra.mxu0 0.0
        %393 = vmatprep.subr.mxu0 0.0
        %394 = vmatpush1.msra.mxu0 0.0
        %395 = vmatprep.subr.mxu0 0.0
        %396 = vmatpush1.msra.mxu0 0.0
        %397 = vmatprep.subr.mxu0 0.0
        %398 = vmatpush1.msra.mxu0 0.0
        %399 = vmatprep.subr.mxu0 0.0
        %400 = vmatpush1.msra.mxu0 0.0
        %401 = vmatprep.subr.mxu0 0.0
        %402 = vmatpush1.msra.mxu0 0.0
        %403 = vmatprep.subr.mxu0 0.0
        %404 = vmatpush1.msra.mxu0 0.0
        %405 = vmatprep.subr.mxu0 0.0
        %406 = vmatpush1.msra.mxu0 0.0
        %407 = vmatprep.subr.mxu0 0.0
        %408 = vmatpush1.msra.mxu0 0.0
        %409 = vmatprep.subr.mxu0 0.0
        %410 = vmatpush1.msra.mxu0 0.0
        %411 = vmatprep.subr.mxu0 0.0
        %412 = vmatpush1.msra.mxu0 0.0
        %413 = vmatprep.subr.mxu0 0.0
        %414 = vmatpush1.msra.mxu0 0.0
        %415 = vmatprep.subr.mxu0 0.0
        %416 = vmatpush1.msra.mxu0 0.0
        %417 = vmatprep.subr.mxu0 0.0
        %418 = vmatpush1.msra.mxu0 %v385
        %419 = vmatprep.subr.mxu0 0.0
        %420 = vmatpush2.msra.mxu0 0.0
        %421 = vmatprep.subr.mxu0 0.0
        %422 = vmatpush2.msra.mxu0 0.0
        %423 = vmatprep.subr.mxu0 0.0
        %424 = vmatpush2.msra.mxu0 0.0
        %425 = vmatprep.subr.mxu0 0.0
        %426 = vmatpush2.msra.mxu0 0.0
        %427 = vmatprep.subr.mxu0 0.0
        %428 = vmatpush2.msra.mxu0 0.0
        %429 = vmatprep.subr.mxu0 0.0
        %430 = vmatpush2.msra.mxu0 0.0
        %431 = vmatprep.subr.mxu0 0.0
        %432 = vmatpush2.msra.mxu0 0.0
        %433 = vmatprep.subr.mxu0 0.0
        %434 = vmatpush2.msra.mxu0 0.0
        %435 = vmatprep.subr.mxu0 0.0
        %436 = vmatpush2.msra.mxu0 0.0
        %437 = vmatprep.subr.mxu0 0.0
        %438 = vmatpush2.msra.mxu0 0.0
        %439 = vmatprep.subr.mxu0 0.0
        %440 = vmatpush2.msra.mxu0 0.0
        %441 = vmatprep.subr.mxu0 0.0
        %442 = vmatpush2.msra.mxu0 0.0
        %443 = vmatprep.subr.mxu0 0.0
        %444 = vmatpush2.msra.mxu0 0.0
        %445 = vmatprep.subr.mxu0 0.0
        %446 = vmatpush2.msra.mxu0 0.0
        %447 = vmatprep.subr.mxu0 0.0
        %448 = vmatpush2.msra.mxu0 0.0
        %449 = vmatprep.subr.mxu0 0.0
        %450 = vmatpush2.msra.mxu0 0.0
        %451 = vmatprep.mubr.f32.mxu0 0.0
        %452 = vmatmul.mubr.f32.gmra.mxu0 %v378
        %v453 = vpop.f32.mrf.mxu0
        %v454 = vadd.f32 0.0, %v453
        %v455 = vpop.f32.mrf.mxu0
        %456 = vmatprep.mubr.f32.mxu0 0.0
        %457 = vmatmul.mubr.f32.gmra.mxu0 %v381
        %v458 = vpop.f32.mrf.mxu0
        %v459 = vadd.f32 0.0, %v458
        %v460 = vpop.f32.mrf.mxu0
        %461 = vdwg.mxu0
        %v463 = vsel %vm376, %v277, 0
        %v466 = vsel %vm376, %v278, 0
        %v468 = vsel %vm383, %v364, 0
        %470 = vmatprep.subr.mxu0 0.0
        %471 = vmatpush1.msra.mxu0 0.0
        %472 = vmatprep.subr.mxu0 0.0
        %473 = vmatpush1.msra.mxu0 0.0
        %474 = vmatprep.subr.mxu0 0.0
        %475 = vmatpush1.msra.mxu0 0.0
        %476 = vmatprep.subr.mxu0 0.0
        %477 = vmatpush1.msra.mxu0 0.0
        %478 = vmatprep.subr.mxu0 0.0
        %479 = vmatpush1.msra.mxu0 0.0
        %480 = vmatprep.subr.mxu0 0.0
        %481 = vmatpush1.msra.mxu0 0.0
        %482 = vmatprep.subr.mxu0 0.0
        %483 = vmatpush1.msra.mxu0 0.0
        %484 = vmatprep.subr.mxu0 0.0
        %485 = vmatpush1.msra.mxu0 0.0
        %486 = vmatprep.subr.mxu0 0.0
        %487 = vmatpush1.msra.mxu0 0.0
        %488 = vmatprep.subr.mxu0 0.0
        %489 = vmatpush1.msra.mxu0 0.0
        %490 = vmatprep.subr.mxu0 0.0
        %491 = vmatpush1.msra.mxu0 0.0
        %492 = vmatprep.subr.mxu0 0.0
        %493 = vmatpush1.msra.mxu0 0.0
        %494 = vmatprep.subr.mxu0 0.0
        %495 = vmatpush1.msra.mxu0 0.0
        %496 = vmatprep.subr.mxu0 0.0
        %497 = vmatpush1.msra.mxu0 0.0
        %498 = vmatprep.subr.mxu0 0.0
        %499 = vmatpush1.msra.mxu0 0.0
        %500 = vmatprep.subr.mxu0 0.0
        %501 = vmatpush1.msra.mxu0 %v468
        %502 = vmatprep.subr.mxu0 0.0
        %503 = vmatpush2.msra.mxu0 0.0
        %504 = vmatprep.subr.mxu0 0.0
        %505 = vmatpush2.msra.mxu0 0.0
        %506 = vmatprep.subr.mxu0 0.0
        %507 = vmatpush2.msra.mxu0 0.0
        %508 = vmatprep.subr.mxu0 0.0
        %509 = vmatpush2.msra.mxu0 0.0
        %510 = vmatprep.subr.mxu0 0.0
        %511 = vmatpush2.msra.mxu0 0.0
        %512 = vmatprep.subr.mxu0 0.0
        %513 = vmatpush2.msra.mxu0 0.0
        %514 = vmatprep.subr.mxu0 0.0
        %515 = vmatpush2.msra.mxu0 0.0
        %516 = vmatprep.subr.mxu0 0.0
        %517 = vmatpush2.msra.mxu0 0.0
        %518 = vmatprep.subr.mxu0 0.0
        %519 = vmatpush2.msra.mxu0 0.0
        %520 = vmatprep.subr.mxu0 0.0
        %521 = vmatpush2.msra.mxu0 0.0
        %522 = vmatprep.subr.mxu0 0.0
        %523 = vmatpush2.msra.mxu0 0.0
        %524 = vmatprep.subr.mxu0 0.0
        %525 = vmatpush2.msra.mxu0 0.0
        %526 = vmatprep.subr.mxu0 0.0
        %527 = vmatpush2.msra.mxu0 0.0
        %528 = vmatprep.subr.mxu0 0.0
        %529 = vmatpush2.msra.mxu0 0.0
        %530 = vmatprep.subr.mxu0 0.0
        %531 = vmatpush2.msra.mxu0 0.0
        %532 = vmatprep.subr.mxu0 0.0
        %533 = vmatpush2.msra.mxu0 0.0
        %534 = vmatprep.mubr.f32.mxu0 0.0
        %535 = vmatmul.mubr.f32.gmra.mxu0 %v463
        %v536 = vpop.f32.mrf.mxu0
        %v537 = vadd.f32 %v454, %v536
        %v538 = vpop.f32.mrf.mxu0
        %539 = vmatprep.mubr.f32.mxu0 0.0
        %540 = vmatmul.mubr.f32.gmra.mxu0 %v466
        %v541 = vpop.f32.mrf.mxu0
        %v542 = vadd.f32 %v459, %v541
        %v543 = vpop.f32.mrf.mxu0
        %544 = vdwg.mxu0
        %v546 = vsel %vm376, %v279, 0
        %v549 = vsel %vm376, %v280, 0
        %v552 = vsel %vm383, %v375, 0
        %554 = vmatprep.subr.mxu0 0.0
        %555 = vmatpush1.msra.mxu0 0.0
        %556 = vmatprep.subr.mxu0 0.0
        %557 = vmatpush1.msra.mxu0 0.0
        %558 = vmatprep.subr.mxu0 0.0
        %559 = vmatpush1.msra.mxu0 0.0
        %560 = vmatprep.subr.mxu0 0.0
        %561 = vmatpush1.msra.mxu0 0.0
        %562 = vmatprep.subr.mxu0 0.0
        %563 = vmatpush1.msra.mxu0 0.0
        %564 = vmatprep.subr.mxu0 0.0
        %565 = vmatpush1.msra.mxu0 0.0
        %566 = vmatprep.subr.mxu0 0.0
        %567 = vmatpush1.msra.mxu0 0.0
        %568 = vmatprep.subr.mxu0 0.0
        %569 = vmatpush1.msra.mxu0 0.0
        %570 = vmatprep.subr.mxu0 0.0
        %571 = vmatpush1.msra.mxu0 0.0
        %572 = vmatprep.subr.mxu0 0.0
        %573 = vmatpush1.msra.mxu0 0.0
        %574 = vmatprep.subr.mxu0 0.0
        %575 = vmatpush1.msra.mxu0 0.0
        %576 = vmatprep.subr.mxu0 0.0
        %577 = vmatpush1.msra.mxu0 0.0
        %578 = vmatprep.subr.mxu0 0.0
        %579 = vmatpush1.msra.mxu0 0.0
        %580 = vmatprep.subr.mxu0 0.0
        %581 = vmatpush1.msra.mxu0 0.0
        %582 = vmatprep.subr.mxu0 0.0
        %583 = vmatpush1.msra.mxu0 0.0
        %584 = vmatprep.subr.mxu0 0.0
        %585 = vmatpush1.msra.mxu0 %v552
        %586 = vmatprep.subr.mxu0 0.0
        %587 = vmatpush2.msra.mxu0 0.0
        %588 = vmatprep.subr.mxu0 0.0
        %589 = vmatpush2.msra.mxu0 0.0
        %590 = vmatprep.subr.mxu0 0.0
        %591 = vmatpush2.msra.mxu0 0.0
        %592 = vmatprep.subr.mxu0 0.0
        %593 = vmatpush2.msra.mxu0 0.0
        %594 = vmatprep.subr.mxu0 0.0
        %595 = vmatpush2.msra.mxu0 0.0
        %596 = vmatprep.subr.mxu0 0.0
        %597 = vmatpush2.msra.mxu0 0.0
        %598 = vmatprep.subr.mxu0 0.0
        %599 = vmatpush2.msra.mxu0 0.0
        %600 = vmatprep.subr.mxu0 0.0
        %601 = vmatpush2.msra.mxu0 0.0
        %602 = vmatprep.subr.mxu0 0.0
        %603 = vmatpush2.msra.mxu0 0.0
        %604 = vmatprep.subr.mxu0 0.0
        %605 = vmatpush2.msra.mxu0 0.0
        %606 = vmatprep.subr.mxu0 0.0
        %607 = vmatpush2.msra.mxu0 0.0
        %608 = vmatprep.subr.mxu0 0.0
        %609 = vmatpush2.msra.mxu0 0.0
        %610 = vmatprep.subr.mxu0 0.0
        %611 = vmatpush2.msra.mxu0 0.0
        %612 = vmatprep.subr.mxu0 0.0
        %613 = vmatpush2.msra.mxu0 0.0
        %614 = vmatprep.subr.mxu0 0.0
        %615 = vmatpush2.msra.mxu0 0.0
        %616 = vmatprep.subr.mxu0 0.0
        %617 = vmatpush2.msra.mxu0 0.0
        %618 = vmatprep.mubr.f32.mxu0 0.0
        %619 = vmatmul.mubr.f32.gmra.mxu0 %v546
        %v620 = vpop.f32.mrf.mxu0
        %v621 = vadd.f32 0.0, %v620
        %v622 = vpop.f32.mrf.mxu0
        %623 = vmatprep.mubr.f32.mxu0 0.0
        %624 = vmatmul.mubr.f32.gmra.mxu0 %v549
        %v625 = vpop.f32.mrf.mxu0
        %v626 = vadd.f32 0.0, %v625
        %v627 = vpop.f32.mrf.mxu0
        %628 = vdwg.mxu0
        %v629 = vadd.f32 %v537, %v621
        %v630 = vadd.f32 %v542, %v626
        %632 = vset.pattern.permute.xlu0 0
        %633 = vperm.xlu0 %632, %v282
        %v634 = vpop.permute.xlu0 %633
        %637 = vset.pattern.permute.xlu0 0
        %638 = vperm.xlu0 %637, %v283
        %v639 = vpop.permute.xlu0 %638
        %v641 = vadd.f32 %v629, %v634
        %v642 = vadd.f32 %v630, %v639
        %v643 = vmax.f32 %v641, 0.0
        %v644 = vmax.f32 %v642, 0.0
        %645 = vst [vmem:[%s269] sm:$0xff] %v643
        %646 = vst [vmem:[%s269 + $0x8] sm:$0xff] %v644
        %s647 = sand.u32 %s181, 1
        %s648 = scalar_lea.sflag [#allocation3], %s647
        %s649 = sand.u32 %s181, 1
        %s650 = smul.addr %s649, 16
        %s651 = scalar_lea.vmem [#allocation2], %s650
        // Predicated region
        $region49: #{tpu_custom_call.1} parent=47 // pred_check
          %p652 = pneg %p191
        $region50: #{tpu_custom_call.1} parent=47 // pred_check_branch
          %654 = sbr.rel (%p652) target = $region52
        $region51: #{tpu_custom_call.1} parent=47 // pred_region
          %s656 = ssub.s32 256, 256
          %657 = vsyncadd %s648, %s656
          %s658 = smul.addr %s21, 2
          %s659 = smul.addr %s658, 128
          %s660 = scalar_lea.hbm %s7, %s659
          %s661 = sshll.u32 %s651, 4
          %s662 = int_to_ptr.vmem [resolvable:$true] %s661
          %667 = dma.vmem_to_hbm [thread:$0]  %s662, 256, %s660, %s648, 128, 128, 8
        $region52: #{tpu_custom_call.1} parent=47 // pred_fallthru
          _
      $region48: #{tpu_custom_call.1} parent=5 // pred_fallthru
        _
      %p668 = scmp.le.s32.totalorder 2, %s16
      // Predicated region
      $region53: #{tpu_custom_call.1} parent=5 // pred_check
        %p669 = pneg %p668
      $region54: #{tpu_custom_call.1} parent=5 // pred_check_branch
        %671 = sbr.rel (%p669) target = $region56
      $region55: #{tpu_custom_call.1} parent=5 // pred_region
        %s672 = ssub.s32 %s16, 2
        // Predicated region
        $region57: #{tpu_custom_call.1} parent=55 // pred_check
          %p673 = pneg %p197
        $region58: #{tpu_custom_call.1} parent=55 // pred_check_branch
          %675 = sbr.rel (%p673) target = $region60
        $region59: #{tpu_custom_call.1} parent=55 // pred_region
          %s676 = sand.u32 %s182, 1
          %s677 = scalar_lea.sflag [#allocation3], %s676
          %s678 = sand.u32 %s182, 1
          %s679 = smul.addr %s678, 16
          %s680 = scalar_lea.vmem [#allocation2], %s679
          %681 = dma.done %s677, 256
        $region60: #{tpu_custom_call.1} parent=55 // pred_fallthru
          _
      $region56: #{tpu_custom_call.1} parent=5 // pred_fallthru
        _
    $region6: #{tpu_custom_call.1} parent=1 // loop_footer
      %s20 = sadd.s32 1, %s16
    $region7: #{tpu_custom_call.1} parent=1 // loop_footer_branch
      %15 = sbr.rel target = $region3
    $region8: #{tpu_custom_call.1} parent=1 // loop_exit
      _
    %682 = vsyncpa [#allocation3], 1
    %s683 = scalar_lea.sflag [#allocation3], 1
    %684 = vsyncpa %s683, 1

</llo_original>
